<compile_context>
chip_gen: v5e
topology: v5e:2x2
jax: 0.10.0
libtpu: 0.0.40
codegen_flags: <defaults>
</compile_context>

<pallas_src>
import jax
import jax.numpy as jnp
from jax.experimental import pallas as pl
from jax.experimental.pallas import tpu as pltpu

NUM_CLASSES = 10
NUM_MODELS = 3

# Fixed GA weights from the reference forward(); normalized at trace time.
GA_WEIGHTS = (0.1646, 0.1443, 0.8192)


# ----------------------------------------------------------------------------
# One-time prepack: fold the (frozen) member weights + GA weights into a
# single combined classifier. Runs once, outside the per-call hot path.
# ----------------------------------------------------------------------------
def prepack_ensemble_params(member_weights, member_biases):
    """member_weights: [M, D, C] f32, member_biases: [M, 1, C] f32
    returns (w_comb_bf16 [D, C], b_comb_f32 [1, C])"""
    M, D, C = member_weights.shape
    # The reference forward() hardcodes a length-3 GA weight vector; guard it.
    assert M == len(GA_WEIGHTS), (
        f"Ensemble has {M} members but forward() defines {len(GA_WEIGHTS)} GA weights")
    wsum = sum(GA_WEIGHTS)
    norm = jnp.asarray([w / wsum for w in GA_WEIGHTS], dtype=jnp.float32)  # [M]
    w_comb = jnp.einsum("m,mdc->dc", norm, member_weights.astype(jnp.float32))
    b_comb = jnp.einsum(
        "m,mc->c", norm, member_biases.reshape(M, C).astype(jnp.float32)
    ).reshape(1, C)
    return w_comb.astype(jnp.bfloat16), b_comb


# ----------------------------------------------------------------------------
# Kernel: one MXU matmul + bias add per batch tile.
# ----------------------------------------------------------------------------
def _ensemble_kernel(x_ref, w_ref, b_ref, o_ref):
    # x_ref : VMEM [tb, D]  bf16   flattened input tile
    # w_ref : VMEM [D, C]   bf16   combined (GA-weighted) classifier weight
    # b_ref : VMEM [1, C]   f32    combined bias
    # o_ref : VMEM [tb, C]  f32    final ensemble prediction tile
    logits = jnp.dot(x_ref[...], w_ref[...], preferred_element_type=jnp.float32)
    o_ref[...] = (logits + b_ref[...]).astype(o_ref.dtype)


def _pick_batch_tile(B):
    # Large batches: tile so the grid can shard across TCs / pipeline DMAs
    # (tiles are multiples of 8 sublanes, and of 16 for full bf16 packing).
    for tb in (256, 128, 64, 32, 16):
        if B % tb == 0 and B > tb:
            return tb
    return B  # tiny batch: single grid step


def ensemble_forward(x_nchw, w_comb_bf16, b_comb):
    """x_nchw: [B, C_in, H, W] f32; w_comb_bf16: [D, C] bf16; b_comb: [1, C] f32
    returns: [B, C] f32"""
    B = x_nchw.shape[0]
    D, C = w_comb_bf16.shape
    x_flat = x_nchw.reshape(B, D).astype(jnp.bfloat16)

    tb = _pick_batch_tile(B)
    grid = (B // tb,)

    return pl.pallas_call(
        _ensemble_kernel,
        out_shape=jax.ShapeDtypeStruct((B, C), jnp.float32),
        grid=grid,
        in_specs=[
            pl.BlockSpec((tb, D), lambda i: (i, 0)),   # batch-tiled input
            pl.BlockSpec((D, C), lambda i: (0, 0)),    # weight resident
            pl.BlockSpec((1, C), lambda i: (0, 0)),    # bias resident
        ],
        out_specs=pl.BlockSpec((tb, C), lambda i: (i, 0)),
        compiler_params=pltpu.CompilerParams(
            dimension_semantics=("parallel",)),
    )(x_flat, w_comb_bf16, b_comb)


# ----------------------------------------------------------------------------
# References.
# ----------------------------------------------------------------------------
def reference_forward(x_nchw, w_comb_bf16, b_comb):
    """Pure-JAX reference mirroring the shipped numerics (bf16 x / combined w,
    f32 accumulation)."""
    B = x_nchw.shape[0]
    x_flat = x_nchw.reshape(B, -1).astype(jnp.bfloat16).astype(jnp.float32)
    return x_flat @ w_comb_bf16.astype(jnp.float32) + b_comb


def pytorch_reference(x_nchw, member_weights, member_biases):
    """Pure-f32 per-member reference mirroring the PyTorch Ensemble.forward
    semantics (no bf16 casts, per-member scale then sum)."""
    B = x_nchw.shape[0]
    M = member_weights.shape[0]
    ga = jnp.array(GA_WEIGHTS, dtype=jnp.float32)
    w = ga / jnp.sum(ga)
    x_flat = x_nchw.reshape(B, -1)
    preds = jnp.stack([
        (x_flat @ member_weights[m] + member_biases[m, 0]) * w[m]
        for m in range(M)
    ])
    return jnp.sum(preds, axis=0)


if __name__ == "__main__":
    key = jax.random.PRNGKey(0)
    B, Cin, H, W = 8, 4, 16, 16     # small NCHW input
    D = Cin * H * W                 # 1024

    k_x, k_w, k_b = jax.random.split(key, 3)
    x = jax.random.normal(k_x, (B, Cin, H, W), dtype=jnp.float32)

    # Deterministic synthetic member-model parameters (frozen classifiers).
    # TODO(synk): the reference module's member models are opaque external
    # nets; they are realized here as frozen linear classifiers over the flat
    # input so the ensemble reduction can be folded into a single weight.
    member_w = 0.02 * jax.random.normal(
        k_w, (NUM_MODELS, D, NUM_CLASSES), dtype=jnp.float32)
    member_b = 0.1 * jax.random.normal(
        k_b, (NUM_MODELS, 1, NUM_CLASSES), dtype=jnp.float32)

    # One-time prepack of the frozen ensemble (not in the per-call hot path).
    w_comb, b_comb = jax.block_until_ready(
        prepack_ensemble_params(member_w, member_b))

    out = ensemble_forward(x, w_comb, b_comb)
    out = jax.block_until_ready(out)
    assert out.shape == (B, NUM_CLASSES)

    # Tight check against a reference with identical (intentional) bf16 casts.
    ref = reference_forward(x, w_comb, b_comb)
    assert jnp.allclose(out, ref, atol=1e-3, rtol=1e-3), (
        f"max abs err vs shipped-numerics ref: {jnp.max(jnp.abs(out - ref))}")

    # Looser fidelity check against the pure-f32 PyTorch-semantic ensemble
    # (difference comes only from the documented bf16 input/weight cast).
    ref_f32 = pytorch_reference(x, member_w, member_b)
    assert jnp.max(jnp.abs(out - ref_f32)) < 5e-2, (
        f"max abs err vs f32 PyTorch ref: {jnp.max(jnp.abs(out - ref_f32))}")

    print("KERNEL_OK")
</pallas_src>

<mosaic_0001>
module attributes {stable_mosaic.version = 11 : i64} {
  func.func @_ensemble_kernel(%arg0: i32, %arg1: memref<8x1024xbf16, #tpu.memory_space<vmem>>, %arg2: memref<1024x10xbf16, #tpu.memory_space<vmem>>, %arg3: memref<1x10xf32, #tpu.memory_space<vmem>>, %arg4: memref<8x10xf32, #tpu.memory_space<vmem>>) attributes {dimension_semantics = [#tpu.dimension_semantics<parallel>], iteration_bounds = array<i64: 1>, scalar_prefetch = 0 : i64, scratch_operands = 0 : i64, tpu.core_type = #tpu.core_type<tc>, window_params = [{transform_indices = @transform_0, window_bounds = array<i64: 8, 1024>}, {pipeline_mode = #tpu.pipeline_mode<synchronous>, transform_indices = @transform_1, window_bounds = array<i64: 1024, 10>}, {pipeline_mode = #tpu.pipeline_mode<synchronous>, transform_indices = @transform_2, window_bounds = array<i64: 1, 10>}, {transform_indices = @transform_3, window_bounds = array<i64: 8, 10>}]} {
    %c0 = arith.constant 0 : index
    %c0_0 = arith.constant 0 : index
    %0 = vector.load %arg1[%c0, %c0_0] : memref<8x1024xbf16, #tpu.memory_space<vmem>>, vector<8x1024xbf16>
    %c0_1 = arith.constant 0 : index
    %c0_2 = arith.constant 0 : index
    %1 = vector.load %arg2[%c0_1, %c0_2] : memref<1024x10xbf16, #tpu.memory_space<vmem>>, vector<1024x10xbf16>
    %cst = arith.constant dense<0.000000e+00> : vector<8x10xf32>
    %2 = tpu.matmul %0, %1, %cst {dimension_numbers = #tpu.dot_dimension_numbers<[1], [0], [0], [1], [0, 0, 1, 1], [], []>} : vector<8x1024xbf16>, vector<1024x10xbf16>, vector<8x10xf32> -> vector<8x10xf32>
    %c0_3 = arith.constant 0 : index
    %c0_4 = arith.constant 0 : index
    %3 = vector.load %arg3[%c0_3, %c0_4] : memref<1x10xf32, #tpu.memory_space<vmem>>, vector<1x10xf32>
    %4 = vector.broadcast %3 : vector<1x10xf32> to vector<8x10xf32>
    %5 = arith.addf %2, %4 : vector<8x10xf32>
    %c0_5 = arith.constant 0 : index
    %c0_6 = arith.constant 0 : index
    %6 = vector.load %arg4[%c0_5, %c0_6] : memref<8x10xf32, #tpu.memory_space<vmem>>, vector<8x10xf32>
    tpu.vector_store %arg4[%c0_5, %c0_6], %5 {strides = array<i32>} : memref<8x10xf32, #tpu.memory_space<vmem>>, vector<8x10xf32>,
    return
  }
  func.func @transform_0(%arg0: i32) -> (i32, i32) {
    %c0_i32 = arith.constant 0 : i32
    %c0_i32_0 = arith.constant 0 : i32
    return %arg0, %c0_i32 : i32, i32
  }
  func.func @transform_1(%arg0: i32) -> (i32, i32) {
    %c0_i32 = arith.constant 0 : i32
    %c0_i32_0 = arith.constant 0 : i32
    %c0_i32_1 = arith.constant 0 : i32
    return %c0_i32, %c0_i32_0 : i32, i32
  }
  func.func @transform_2(%arg0: i32) -> (i32, i32) {
    %c0_i32 = arith.constant 0 : i32
    %c0_i32_0 = arith.constant 0 : i32
    %c0_i32_1 = arith.constant 0 : i32
    return %c0_i32, %c0_i32_0 : i32, i32
  }
  func.func @transform_3(%arg0: i32) -> (i32, i32) {
    %c0_i32 = arith.constant 0 : i32
    %c0_i32_0 = arith.constant 0 : i32
    return %arg0, %c0_i32 : i32, i32
  }
}

</mosaic_0001>

<llo_original>
// kernel: tpu_custom_call.1
$region0: #{tpu_custom_call.1}
  #allocation0 [shape = 'u32[]', space=smem, size = 0x4, offset = 0x4, fixed_abs, tag = 'smem constant byte address 0x4 - core index']
  #allocation1 [shape = 'u32[72,128]{1,0:T(1,128)}', space=vmem, size = 0x9000, scoped, tag = 'internal scratch']
  %s0 = inlined_call_operand.vmem [shape: bf16[8,1024], index: 0, kind: input, shape index: {}]
  %s1 = inlined_call_operand.vmem [shape: bf16[1024,10], index: 1, kind: input, shape index: {}]
  %s2 = inlined_call_operand.vmem [shape: f32[1,10], index: 2, kind: input, shape index: {}]
  %s3 = inlined_call_operand.hbm [shape: f32[8,10], index: 3, kind: output, shape index: {}]
  %s4 = sld [smem:[#allocation0]]
  $region22: #{tpu_custom_call.1} parent=0
    _
  %s6 = ssub.s32 1, %s4
  %s7 = scalar_select 0, %s6, %s4
  $region1: #{tpu_custom_call.1} parent=0
    #allocation2 [shape = 'u8[4096]{0}', space=vmem, size = 0x1000, scoped, tag = 'output window, operand 0, single buffered']
    #allocation3 [shape = 's32[1]{0}', space=sflag, size = 0x4, scoped, tag = 'scoped memory for tpu_custom_call.1']
    %8 = vsyncpa [#allocation3], 0
    // Predicated region
    $region2: #{tpu_custom_call.1} parent=1 // pred_check
      _
    $region3: #{tpu_custom_call.1} parent=1 // pred_check_branch
      %10 = sbr.rel (0) target = $region5
    $region4: #{tpu_custom_call.1} parent=1 // pred_region
      _
    $region5: #{tpu_custom_call.1} parent=1 // pred_fallthru
      _
    // Predicated region
    $region6: #{tpu_custom_call.1} parent=1 // pred_check
      _
    $region7: #{tpu_custom_call.1} parent=1 // pred_check_branch
      %12 = sbr.rel (0) target = $region9
    $region8: #{tpu_custom_call.1} parent=1 // pred_region
      _
    $region9: #{tpu_custom_call.1} parent=1 // pred_fallthru
      _
    // Predicated region
    $region10: #{tpu_custom_call.1} parent=1 // pred_check
      _
    $region11: #{tpu_custom_call.1} parent=1 // pred_check_branch
      %14 = sbr.rel (0) target = $region13
    $region12: #{tpu_custom_call.1} parent=1 // pred_region
      _
    $region13: #{tpu_custom_call.1} parent=1 // pred_fallthru
      _
    %v15 = vld [vmem:[%s0] sm:$0xff]
    %v16 = vld [vmem:[%s0 + $0x8] sm:$0xff]
    %v17 = vld [vmem:[%s0 + $0x10] sm:$0xff]
    %v18 = vld [vmem:[%s0 + $0x18] sm:$0xff]
    %v19 = vld [vmem:[%s1] sm:$0xf]
    %v20 = vld [vmem:[%s1 + $0x4] sm:$0xf]
    %v21 = vld [vmem:[%s1 + $0x8] sm:$0xf]
    %v22 = vld [vmem:[%s1 + $0xc] sm:$0xf]
    %v23 = vld [vmem:[%s1 + $0x10] sm:$0xf]
    %v24 = vld [vmem:[%s1 + $0x14] sm:$0xf]
    %v25 = vld [vmem:[%s1 + $0x18] sm:$0xf]
    %v26 = vld [vmem:[%s1 + $0x1c] sm:$0xf]
    %v27 = vld [vmem:[%s1 + $0x20] sm:$0xf]
    %v28 = vld [vmem:[%s1 + $0x24] sm:$0xf]
    %v29 = vld [vmem:[%s1 + $0x28] sm:$0xf]
    %v30 = vld [vmem:[%s1 + $0x2c] sm:$0xf]
    %v31 = vld [vmem:[%s1 + $0x30] sm:$0xf]
    %v32 = vld [vmem:[%s1 + $0x34] sm:$0xf]
    %v33 = vld [vmem:[%s1 + $0x38] sm:$0xf]
    %v34 = vld [vmem:[%s1 + $0x3c] sm:$0xf]
    %v35 = vld [vmem:[%s1 + $0x40] sm:$0xf]
    %v36 = vld [vmem:[%s1 + $0x44] sm:$0xf]
    %v37 = vld [vmem:[%s1 + $0x48] sm:$0xf]
    %v38 = vld [vmem:[%s1 + $0x4c] sm:$0xf]
    %v39 = vld [vmem:[%s1 + $0x50] sm:$0xf]
    %v40 = vld [vmem:[%s1 + $0x54] sm:$0xf]
    %v41 = vld [vmem:[%s1 + $0x58] sm:$0xf]
    %v42 = vld [vmem:[%s1 + $0x5c] sm:$0xf]
    %v43 = vld [vmem:[%s1 + $0x60] sm:$0xf]
    %v44 = vld [vmem:[%s1 + $0x64] sm:$0xf]
    %v45 = vld [vmem:[%s1 + $0x68] sm:$0xf]
    %v46 = vld [vmem:[%s1 + $0x6c] sm:$0xf]
    %v47 = vld [vmem:[%s1 + $0x70] sm:$0xf]
    %v48 = vld [vmem:[%s1 + $0x74] sm:$0xf]
    %v49 = vld [vmem:[%s1 + $0x78] sm:$0xf]
    %v50 = vld [vmem:[%s1 + $0x7c] sm:$0xf]
    %v51 = vld [vmem:[%s1 + $0x80] sm:$0xf]
    %v52 = vld [vmem:[%s1 + $0x84] sm:$0xf]
    %v53 = vld [vmem:[%s1 + $0x88] sm:$0xf]
    %v54 = vld [vmem:[%s1 + $0x8c] sm:$0xf]
    %v55 = vld [vmem:[%s1 + $0x90] sm:$0xf]
    %v56 = vld [vmem:[%s1 + $0x94] sm:$0xf]
    %v57 = vld [vmem:[%s1 + $0x98] sm:$0xf]
    %v58 = vld [vmem:[%s1 + $0x9c] sm:$0xf]
    %v59 = vld [vmem:[%s1 + $0xa0] sm:$0xf]
    %v60 = vld [vmem:[%s1 + $0xa4] sm:$0xf]
    %v61 = vld [vmem:[%s1 + $0xa8] sm:$0xf]
    %v62 = vld [vmem:[%s1 + $0xac] sm:$0xf]
    %v63 = vld [vmem:[%s1 + $0xb0] sm:$0xf]
    %v64 = vld [vmem:[%s1 + $0xb4] sm:$0xf]
    %v65 = vld [vmem:[%s1 + $0xb8] sm:$0xf]
    %v66 = vld [vmem:[%s1 + $0xbc] sm:$0xf]
    %v67 = vld [vmem:[%s1 + $0xc0] sm:$0xf]
    %v68 = vld [vmem:[%s1 + $0xc4] sm:$0xf]
    %v69 = vld [vmem:[%s1 + $0xc8] sm:$0xf]
    %v70 = vld [vmem:[%s1 + $0xcc] sm:$0xf]
    %v71 = vld [vmem:[%s1 + $0xd0] sm:$0xf]
    %v72 = vld [vmem:[%s1 + $0xd4] sm:$0xf]
    %v73 = vld [vmem:[%s1 + $0xd8] sm:$0xf]
    %v74 = vld [vmem:[%s1 + $0xdc] sm:$0xf]
    %v75 = vld [vmem:[%s1 + $0xe0] sm:$0xf]
    %v76 = vld [vmem:[%s1 + $0xe4] sm:$0xf]
    %v77 = vld [vmem:[%s1 + $0xe8] sm:$0xf]
    %v78 = vld [vmem:[%s1 + $0xec] sm:$0xf]
    %v79 = vld [vmem:[%s1 + $0xf0] sm:$0xf]
    %v80 = vld [vmem:[%s1 + $0xf4] sm:$0xf]
    %v81 = vld [vmem:[%s1 + $0xf8] sm:$0xf]
    %v82 = vld [vmem:[%s1 + $0xfc] sm:$0xf]
    %v83 = vld [vmem:[%s1 + $0x100] sm:$0xf]
    %v84 = vld [vmem:[%s1 + $0x104] sm:$0xf]
    %v85 = vld [vmem:[%s1 + $0x108] sm:$0xf]
    %v86 = vld [vmem:[%s1 + $0x10c] sm:$0xf]
    %v87 = vld [vmem:[%s1 + $0x110] sm:$0xf]
    %v88 = vld [vmem:[%s1 + $0x114] sm:$0xf]
    %v89 = vld [vmem:[%s1 + $0x118] sm:$0xf]
    %v90 = vld [vmem:[%s1 + $0x11c] sm:$0xf]
    %v91 = vld [vmem:[%s1 + $0x120] sm:$0xf]
    %v92 = vld [vmem:[%s1 + $0x124] sm:$0xf]
    %v93 = vld [vmem:[%s1 + $0x128] sm:$0xf]
    %v94 = vld [vmem:[%s1 + $0x12c] sm:$0xf]
    %v95 = vld [vmem:[%s1 + $0x130] sm:$0xf]
    %v96 = vld [vmem:[%s1 + $0x134] sm:$0xf]
    %v97 = vld [vmem:[%s1 + $0x138] sm:$0xf]
    %v98 = vld [vmem:[%s1 + $0x13c] sm:$0xf]
    %v99 = vld [vmem:[%s1 + $0x140] sm:$0xf]
    %v100 = vld [vmem:[%s1 + $0x144] sm:$0xf]
    %v101 = vld [vmem:[%s1 + $0x148] sm:$0xf]
    %v102 = vld [vmem:[%s1 + $0x14c] sm:$0xf]
    %v103 = vld [vmem:[%s1 + $0x150] sm:$0xf]
    %v104 = vld [vmem:[%s1 + $0x154] sm:$0xf]
    %v105 = vld [vmem:[%s1 + $0x158] sm:$0xf]
    %v106 = vld [vmem:[%s1 + $0x15c] sm:$0xf]
    %v107 = vld [vmem:[%s1 + $0x160] sm:$0xf]
    %v108 = vld [vmem:[%s1 + $0x164] sm:$0xf]
    %v109 = vld [vmem:[%s1 + $0x168] sm:$0xf]
    %v110 = vld [vmem:[%s1 + $0x16c] sm:$0xf]
    %v111 = vld [vmem:[%s1 + $0x170] sm:$0xf]
    %v112 = vld [vmem:[%s1 + $0x174] sm:$0xf]
    %v113 = vld [vmem:[%s1 + $0x178] sm:$0xf]
    %v114 = vld [vmem:[%s1 + $0x17c] sm:$0xf]
    %v115 = vld [vmem:[%s1 + $0x180] sm:$0xf]
    %v116 = vld [vmem:[%s1 + $0x184] sm:$0xf]
    %v117 = vld [vmem:[%s1 + $0x188] sm:$0xf]
    %v118 = vld [vmem:[%s1 + $0x18c] sm:$0xf]
    %v119 = vld [vmem:[%s1 + $0x190] sm:$0xf]
    %v120 = vld [vmem:[%s1 + $0x194] sm:$0xf]
    %v121 = vld [vmem:[%s1 + $0x198] sm:$0xf]
    %v122 = vld [vmem:[%s1 + $0x19c] sm:$0xf]
    %v123 = vld [vmem:[%s1 + $0x1a0] sm:$0xf]
    %v124 = vld [vmem:[%s1 + $0x1a4] sm:$0xf]
    %v125 = vld [vmem:[%s1 + $0x1a8] sm:$0xf]
    %v126 = vld [vmem:[%s1 + $0x1ac] sm:$0xf]
    %v127 = vld [vmem:[%s1 + $0x1b0] sm:$0xf]
    %v128 = vld [vmem:[%s1 + $0x1b4] sm:$0xf]
    %v129 = vld [vmem:[%s1 + $0x1b8] sm:$0xf]
    %v130 = vld [vmem:[%s1 + $0x1bc] sm:$0xf]
    %v131 = vld [vmem:[%s1 + $0x1c0] sm:$0xf]
    %v132 = vld [vmem:[%s1 + $0x1c4] sm:$0xf]
    %v133 = vld [vmem:[%s1 + $0x1c8] sm:$0xf]
    %v134 = vld [vmem:[%s1 + $0x1cc] sm:$0xf]
    %v135 = vld [vmem:[%s1 + $0x1d0] sm:$0xf]
    %v136 = vld [vmem:[%s1 + $0x1d4] sm:$0xf]
    %v137 = vld [vmem:[%s1 + $0x1d8] sm:$0xf]
    %v138 = vld [vmem:[%s1 + $0x1dc] sm:$0xf]
    %v139 = vld [vmem:[%s1 + $0x1e0] sm:$0xf]
    %v140 = vld [vmem:[%s1 + $0x1e4] sm:$0xf]
    %v141 = vld [vmem:[%s1 + $0x1e8] sm:$0xf]
    %v142 = vld [vmem:[%s1 + $0x1ec] sm:$0xf]
    %v143 = vld [vmem:[%s1 + $0x1f0] sm:$0xf]
    %v144 = vld [vmem:[%s1 + $0x1f4] sm:$0xf]
    %v145 = vld [vmem:[%s1 + $0x1f8] sm:$0xf]
    %v146 = vld [vmem:[%s1 + $0x1fc] sm:$0xf]
    %v147 = vld [vmem:[%s2] sm:$0x1]
    %v149 = vperm.slane %v147, 0
    %v155 = vunpack.c.l.b16 %v15
    %v156 = vunpack.c.h.b16 %v15
    %v157 = vunpack.c.l.b16 %v16
    %v158 = vunpack.c.h.b16 %v16
    %v159 = vunpack.c.l.b16 %v17
    %v160 = vunpack.c.h.b16 %v17
    %v161 = vunpack.c.l.b16 %v18
    %v162 = vunpack.c.h.b16 %v18
    %v163 = vpack.c.b16 %v155, %v155
    %v164 = vpack.c.b16 %v156, %v156
    %v165 = vpack.c.b16 %v157, %v157
    %v166 = vpack.c.b16 %v158, %v158
    %v167 = vpack.c.b16 %v159, %v159
    %v168 = vpack.c.b16 %v160, %v160
    %v169 = vpack.c.b16 %v161, %v161
    %v170 = vpack.c.b16 %v162, %v162
    %v307 = vunpack.c.l.b16 %v19
    %v308 = vunpack.c.l.b16 %v20
    %v309 = vunpack.c.l.b16 %v21
    %v310 = vunpack.c.l.b16 %v22
    %v311 = vunpack.c.l.b16 %v23
    %v312 = vunpack.c.l.b16 %v24
    %v313 = vunpack.c.l.b16 %v25
    %v314 = vunpack.c.l.b16 %v26
    %v315 = vunpack.c.l.b16 %v27
    %v316 = vunpack.c.l.b16 %v28
    %v317 = vunpack.c.l.b16 %v29
    %v318 = vunpack.c.l.b16 %v30
    %v319 = vunpack.c.l.b16 %v31
    %v320 = vunpack.c.l.b16 %v32
    %v321 = vunpack.c.l.b16 %v33
    %v322 = vunpack.c.l.b16 %v34
    %v323 = vunpack.c.l.b16 %v35
    %v324 = vunpack.c.l.b16 %v36
    %v325 = vunpack.c.l.b16 %v37
    %v326 = vunpack.c.l.b16 %v38
    %v327 = vunpack.c.l.b16 %v39
    %v328 = vunpack.c.l.b16 %v40
    %v329 = vunpack.c.l.b16 %v41
    %v330 = vunpack.c.l.b16 %v42
    %v331 = vunpack.c.l.b16 %v43
    %v332 = vunpack.c.l.b16 %v44
    %v333 = vunpack.c.l.b16 %v45
    %v334 = vunpack.c.l.b16 %v46
    %v335 = vunpack.c.l.b16 %v47
    %v336 = vunpack.c.l.b16 %v48
    %v337 = vunpack.c.l.b16 %v49
    %v338 = vunpack.c.l.b16 %v50
    %v339 = vunpack.c.l.b16 %v51
    %v340 = vunpack.c.l.b16 %v52
    %v341 = vunpack.c.l.b16 %v53
    %v342 = vunpack.c.l.b16 %v54
    %v343 = vunpack.c.l.b16 %v55
    %v344 = vunpack.c.l.b16 %v56
    %v345 = vunpack.c.l.b16 %v57
    %v346 = vunpack.c.l.b16 %v58
    %v347 = vunpack.c.l.b16 %v59
    %v348 = vunpack.c.l.b16 %v60
    %v349 = vunpack.c.l.b16 %v61
    %v350 = vunpack.c.l.b16 %v62
    %v351 = vunpack.c.l.b16 %v63
    %v352 = vunpack.c.l.b16 %v64
    %v353 = vunpack.c.l.b16 %v65
    %v354 = vunpack.c.l.b16 %v66
    %v355 = vunpack.c.l.b16 %v67
    %v356 = vunpack.c.l.b16 %v68
    %v357 = vunpack.c.l.b16 %v69
    %v358 = vunpack.c.l.b16 %v70
    %v359 = vunpack.c.l.b16 %v71
    %v360 = vunpack.c.l.b16 %v72
    %v361 = vunpack.c.l.b16 %v73
    %v362 = vunpack.c.l.b16 %v74
    %v363 = vunpack.c.l.b16 %v75
    %v364 = vunpack.c.l.b16 %v76
    %v365 = vunpack.c.l.b16 %v77
    %v366 = vunpack.c.l.b16 %v78
    %v367 = vunpack.c.l.b16 %v79
    %v368 = vunpack.c.l.b16 %v80
    %v369 = vunpack.c.l.b16 %v81
    %v370 = vunpack.c.l.b16 %v82
    %v371 = vunpack.c.l.b16 %v83
    %v372 = vunpack.c.l.b16 %v84
    %v373 = vunpack.c.l.b16 %v85
    %v374 = vunpack.c.l.b16 %v86
    %v375 = vunpack.c.l.b16 %v87
    %v376 = vunpack.c.l.b16 %v88
    %v377 = vunpack.c.l.b16 %v89
    %v378 = vunpack.c.l.b16 %v90
    %v379 = vunpack.c.l.b16 %v91
    %v380 = vunpack.c.l.b16 %v92
    %v381 = vunpack.c.l.b16 %v93
    %v382 = vunpack.c.l.b16 %v94
    %v383 = vunpack.c.l.b16 %v95
    %v384 = vunpack.c.l.b16 %v96
    %v385 = vunpack.c.l.b16 %v97
    %v386 = vunpack.c.l.b16 %v98
    %v387 = vunpack.c.l.b16 %v99
    %v388 = vunpack.c.l.b16 %v100
    %v389 = vunpack.c.l.b16 %v101
    %v390 = vunpack.c.l.b16 %v102
    %v391 = vunpack.c.l.b16 %v103
    %v392 = vunpack.c.l.b16 %v104
    %v393 = vunpack.c.l.b16 %v105
    %v394 = vunpack.c.l.b16 %v106
    %v395 = vunpack.c.l.b16 %v107
    %v396 = vunpack.c.l.b16 %v108
    %v397 = vunpack.c.l.b16 %v109
    %v398 = vunpack.c.l.b16 %v110
    %v399 = vunpack.c.l.b16 %v111
    %v400 = vunpack.c.l.b16 %v112
    %v401 = vunpack.c.l.b16 %v113
    %v402 = vunpack.c.l.b16 %v114
    %v403 = vunpack.c.l.b16 %v115
    %v404 = vunpack.c.l.b16 %v116
    %v405 = vunpack.c.l.b16 %v117
    %v406 = vunpack.c.l.b16 %v118
    %v407 = vunpack.c.l.b16 %v119
    %v408 = vunpack.c.l.b16 %v120
    %v409 = vunpack.c.l.b16 %v121
    %v410 = vunpack.c.l.b16 %v122
    %v411 = vunpack.c.l.b16 %v123
    %v412 = vunpack.c.l.b16 %v124
    %v413 = vunpack.c.l.b16 %v125
    %v414 = vunpack.c.l.b16 %v126
    %v415 = vunpack.c.l.b16 %v127
    %v416 = vunpack.c.l.b16 %v128
    %v417 = vunpack.c.l.b16 %v129
    %v418 = vunpack.c.l.b16 %v130
    %v419 = vunpack.c.l.b16 %v131
    %v420 = vunpack.c.l.b16 %v132
    %v421 = vunpack.c.l.b16 %v133
    %v422 = vunpack.c.l.b16 %v134
    %v423 = vunpack.c.l.b16 %v135
    %v424 = vunpack.c.l.b16 %v136
    %v425 = vunpack.c.l.b16 %v137
    %v426 = vunpack.c.l.b16 %v138
    %v427 = vunpack.c.l.b16 %v139
    %v428 = vunpack.c.l.b16 %v140
    %v429 = vunpack.c.l.b16 %v141
    %v430 = vunpack.c.l.b16 %v142
    %v431 = vunpack.c.l.b16 %v143
    %v432 = vunpack.c.l.b16 %v144
    %v433 = vunpack.c.l.b16 %v145
    %v434 = vunpack.c.l.b16 %v146
    %v435 = vpack.c.b16 %v308, %v307
    %v436 = vpack.c.b16 %v310, %v309
    %v437 = vpack.c.b16 %v312, %v311
    %v438 = vpack.c.b16 %v314, %v313
    %v439 = vpack.c.b16 %v316, %v315
    %v440 = vpack.c.b16 %v318, %v317
    %v441 = vpack.c.b16 %v320, %v319
    %v442 = vpack.c.b16 %v322, %v321
    %v443 = vpack.c.b16 %v324, %v323
    %v444 = vpack.c.b16 %v326, %v325
    %v445 = vpack.c.b16 %v328, %v327
    %v446 = vpack.c.b16 %v330, %v329
    %v447 = vpack.c.b16 %v332, %v331
    %v448 = vpack.c.b16 %v334, %v333
    %v449 = vpack.c.b16 %v336, %v335
    %v450 = vpack.c.b16 %v338, %v337
    %v451 = vpack.c.b16 %v340, %v339
    %v452 = vpack.c.b16 %v342, %v341
    %v453 = vpack.c.b16 %v344, %v343
    %v454 = vpack.c.b16 %v346, %v345
    %v455 = vpack.c.b16 %v348, %v347
    %v456 = vpack.c.b16 %v350, %v349
    %v457 = vpack.c.b16 %v352, %v351
    %v458 = vpack.c.b16 %v354, %v353
    %v459 = vpack.c.b16 %v356, %v355
    %v460 = vpack.c.b16 %v358, %v357
    %v461 = vpack.c.b16 %v360, %v359
    %v462 = vpack.c.b16 %v362, %v361
    %v463 = vpack.c.b16 %v364, %v363
    %v464 = vpack.c.b16 %v366, %v365
    %v465 = vpack.c.b16 %v368, %v367
    %v466 = vpack.c.b16 %v370, %v369
    %v467 = vpack.c.b16 %v372, %v371
    %v468 = vpack.c.b16 %v374, %v373
    %v469 = vpack.c.b16 %v376, %v375
    %v470 = vpack.c.b16 %v378, %v377
    %v471 = vpack.c.b16 %v380, %v379
    %v472 = vpack.c.b16 %v382, %v381
    %v473 = vpack.c.b16 %v384, %v383
    %v474 = vpack.c.b16 %v386, %v385
    %v475 = vpack.c.b16 %v388, %v387
    %v476 = vpack.c.b16 %v390, %v389
    %v477 = vpack.c.b16 %v392, %v391
    %v478 = vpack.c.b16 %v394, %v393
    %v479 = vpack.c.b16 %v396, %v395
    %v480 = vpack.c.b16 %v398, %v397
    %v481 = vpack.c.b16 %v400, %v399
    %v482 = vpack.c.b16 %v402, %v401
    %v483 = vpack.c.b16 %v404, %v403
    %v484 = vpack.c.b16 %v406, %v405
    %v485 = vpack.c.b16 %v408, %v407
    %v486 = vpack.c.b16 %v410, %v409
    %v487 = vpack.c.b16 %v412, %v411
    %v488 = vpack.c.b16 %v414, %v413
    %v489 = vpack.c.b16 %v416, %v415
    %v490 = vpack.c.b16 %v418, %v417
    %v491 = vpack.c.b16 %v420, %v419
    %v492 = vpack.c.b16 %v422, %v421
    %v493 = vpack.c.b16 %v424, %v423
    %v494 = vpack.c.b16 %v426, %v425
    %v495 = vpack.c.b16 %v428, %v427
    %v496 = vpack.c.b16 %v430, %v429
    %v497 = vpack.c.b16 %v432, %v431
    %v498 = vpack.c.b16 %v434, %v433
    %563 = vmatpush.bf16.msra.mxu0 %v442
    %564 = vmatpush.bf16.msra.mxu0 %v441
    %565 = vmatpush.bf16.msra.mxu0 %v440
    %566 = vmatpush.bf16.msra.mxu0 %v439
    %567 = vmatpush.bf16.msra.mxu0 %v438
    %568 = vmatpush.bf16.msra.mxu0 %v437
    %569 = vmatpush.bf16.msra.mxu0 %v436
    %570 = vmatpush.bf16.msra.mxu0 %v435
    %571 = vmatmul.bf16.gmra.mxu0 %v163
    %v572 = vpop.f32.mrf.mxu0
    %v573 = vadd.f32 %v149, %v572
    %v574 = vpop.f32.mrf.mxu0
    %575 = vdwg.mxu0
    %576 = vmatpush.bf16.msra.mxu0 %v450
    %577 = vmatpush.bf16.msra.mxu0 %v449
    %578 = vmatpush.bf16.msra.mxu0 %v448
    %579 = vmatpush.bf16.msra.mxu0 %v447
    %580 = vmatpush.bf16.msra.mxu0 %v446
    %581 = vmatpush.bf16.msra.mxu0 %v445
    %582 = vmatpush.bf16.msra.mxu0 %v444
    %583 = vmatpush.bf16.msra.mxu0 %v443
    %584 = vmatmul.bf16.gmra.mxu0 %v164
    %v585 = vpop.f32.mrf.mxu0
    %v586 = vadd.f32 %v573, %v585
    %v587 = vpop.f32.mrf.mxu0
    %588 = vdwg.mxu0
    %589 = vmatpush.bf16.msra.mxu0 %v458
    %590 = vmatpush.bf16.msra.mxu0 %v457
    %591 = vmatpush.bf16.msra.mxu0 %v456
    %592 = vmatpush.bf16.msra.mxu0 %v455
    %593 = vmatpush.bf16.msra.mxu0 %v454
    %594 = vmatpush.bf16.msra.mxu0 %v453
    %595 = vmatpush.bf16.msra.mxu0 %v452
    %596 = vmatpush.bf16.msra.mxu0 %v451
    %597 = vmatmul.bf16.gmra.mxu0 %v165
    %v598 = vpop.f32.mrf.mxu0
    %v599 = vadd.f32 %v586, %v598
    %v600 = vpop.f32.mrf.mxu0
    %601 = vdwg.mxu0
    %602 = vmatpush.bf16.msra.mxu0 %v466
    %603 = vmatpush.bf16.msra.mxu0 %v465
    %604 = vmatpush.bf16.msra.mxu0 %v464
    %605 = vmatpush.bf16.msra.mxu0 %v463
    %606 = vmatpush.bf16.msra.mxu0 %v462
    %607 = vmatpush.bf16.msra.mxu0 %v461
    %608 = vmatpush.bf16.msra.mxu0 %v460
    %609 = vmatpush.bf16.msra.mxu0 %v459
    %610 = vmatmul.bf16.gmra.mxu0 %v166
    %v611 = vpop.f32.mrf.mxu0
    %v612 = vadd.f32 %v599, %v611
    %v613 = vpop.f32.mrf.mxu0
    %614 = vdwg.mxu0
    %615 = vmatpush.bf16.msra.mxu0 %v474
    %616 = vmatpush.bf16.msra.mxu0 %v473
    %617 = vmatpush.bf16.msra.mxu0 %v472
    %618 = vmatpush.bf16.msra.mxu0 %v471
    %619 = vmatpush.bf16.msra.mxu0 %v470
    %620 = vmatpush.bf16.msra.mxu0 %v469
    %621 = vmatpush.bf16.msra.mxu0 %v468
    %622 = vmatpush.bf16.msra.mxu0 %v467
    %623 = vmatmul.bf16.gmra.mxu0 %v167
    %v624 = vpop.f32.mrf.mxu0
    %v625 = vadd.f32 %v612, %v624
    %v626 = vpop.f32.mrf.mxu0
    %627 = vdwg.mxu0
    %628 = vmatpush.bf16.msra.mxu0 %v482
    %629 = vmatpush.bf16.msra.mxu0 %v481
    %630 = vmatpush.bf16.msra.mxu0 %v480
    %631 = vmatpush.bf16.msra.mxu0 %v479
    %632 = vmatpush.bf16.msra.mxu0 %v478
    %633 = vmatpush.bf16.msra.mxu0 %v477
    %634 = vmatpush.bf16.msra.mxu0 %v476
    %635 = vmatpush.bf16.msra.mxu0 %v475
    %636 = vmatmul.bf16.gmra.mxu0 %v168
    %v637 = vpop.f32.mrf.mxu0
    %v638 = vadd.f32 %v625, %v637
    %v639 = vpop.f32.mrf.mxu0
    %640 = vdwg.mxu0
    %641 = vmatpush.bf16.msra.mxu0 %v490
    %642 = vmatpush.bf16.msra.mxu0 %v489
    %643 = vmatpush.bf16.msra.mxu0 %v488
    %644 = vmatpush.bf16.msra.mxu0 %v487
    %645 = vmatpush.bf16.msra.mxu0 %v486
    %646 = vmatpush.bf16.msra.mxu0 %v485
    %647 = vmatpush.bf16.msra.mxu0 %v484
    %648 = vmatpush.bf16.msra.mxu0 %v483
    %649 = vmatmul.bf16.gmra.mxu0 %v169
    %v650 = vpop.f32.mrf.mxu0
    %v651 = vadd.f32 %v638, %v650
    %v652 = vpop.f32.mrf.mxu0
    %653 = vdwg.mxu0
    %654 = vmatpush.bf16.msra.mxu0 %v498
    %655 = vmatpush.bf16.msra.mxu0 %v497
    %656 = vmatpush.bf16.msra.mxu0 %v496
    %657 = vmatpush.bf16.msra.mxu0 %v495
    %658 = vmatpush.bf16.msra.mxu0 %v494
    %659 = vmatpush.bf16.msra.mxu0 %v493
    %660 = vmatpush.bf16.msra.mxu0 %v492
    %661 = vmatpush.bf16.msra.mxu0 %v491
    %662 = vmatmul.bf16.gmra.mxu0 %v170
    %v663 = vpop.f32.mrf.mxu0
    %v664 = vadd.f32 %v651, %v663
    %v665 = vpop.f32.mrf.mxu0
    %666 = vdwg.mxu0
    %vm667 = vcmask 80896
    %668 = vst.msk [vmem:[#allocation2] sm:$0xff] %vm667, %v664
    // Predicated region
    $region14: #{tpu_custom_call.1} parent=1 // pred_check
      _
    $region15: #{tpu_custom_call.1} parent=1 // pred_check_branch
      %670 = sbr.rel (0) target = $region17
    $region16: #{tpu_custom_call.1} parent=1 // pred_region
      %672 = vsyncadd [#allocation3], 0
      %s674 = sshll.u32 [#allocation2], 4
      %s675 = int_to_ptr.vmem [resolvable:$true] %s674
      %s676 = sshll.u32 %s3, 4
      %s677 = int_to_ptr.hbm [resolvable:$true] %s676
      %679 = dma.vmem_to_hbm [thread:$0]  %s675, 128, %s677, [#allocation3]
    $region17: #{tpu_custom_call.1} parent=1 // pred_fallthru
      _
    // Predicated region
    $region18: #{tpu_custom_call.1} parent=1 // pred_check
      _
    $region19: #{tpu_custom_call.1} parent=1 // pred_check_branch
      %681 = sbr.rel (0) target = $region21
    $region20: #{tpu_custom_call.1} parent=1 // pred_region
      %683 = dma.done [#allocation3], 128
    $region21: #{tpu_custom_call.1} parent=1 // pred_fallthru
      _
    %684 = vsyncpa [#allocation3], 1

</llo_original>
